<compile_context>
chip_gen: v7x
topology: tpu7x:2x2x1
jax: 0.10.0
libtpu: 0.0.40
codegen_flags: <defaults>
</compile_context>

<pallas_src>
import functools

import numpy as np
import jax
import jax.numpy as jnp
from jax import lax
from jax.experimental import pallas as pl
from jax.experimental.pallas import tpu as pltpu


def _round_up(x, m):
    return ((x + m - 1) // m) * m


def _conv1d_block_kernel(x_ref, w_ref, b_ref, gamma_ref, beta_ref, p_ref,
                         o_ref, *, K, gsize, eps):
    # x_ref     : (Bt, L + K - 1, Cin)  bf16, channels-last, zero-padded along L
    # w_ref     : (K, Cin, C)           bf16, tap-major conv weight (C = padded Cout)
    # b_ref     : (1, C)  f32           conv bias
    # gamma_ref : (1, C)  f32           GroupNorm scale
    # beta_ref  : (1, C)  f32           GroupNorm shift
    # p_ref     : (C, C)  f32           P[c, c'] = 1 iff channels c, c' share a group
    # o_ref     : (Bt, L, C)            fused output tile
    Bt, L, C = o_ref.shape
    Cin = x_ref.shape[2]
    rows = Bt * L                     # NOTE: L a multiple of 8 keeps reshapes free

    # ---- Conv1d: K per-tap MXU matmuls, bf16 x bf16 -> f32 accumulation ----
    acc = jnp.zeros((rows, C), jnp.float32)
    for k in range(K):                                       # static unrolled taps
        xk = x_ref[:, k:k + L, :].reshape(rows, Cin)         # (Bt*L, Cin) bf16
        acc = acc + jnp.dot(xk, w_ref[k],
                            preferred_element_type=jnp.float32)
    y = (acc + b_ref[...]).reshape(Bt, L, C)                 # + conv bias, f32

    # ---- GroupNorm: one stats pass, group mix via P matmul, biased variance ----
    inv_n = jnp.float32(1.0 / (L * gsize))
    s1 = jnp.sum(y, axis=1)                                  # (Bt, C)  sum(y)
    s2 = jnp.sum(y * y, axis=1)                              # (Bt, C)  sum(y^2)
    gs = jnp.dot(jnp.concatenate([s1, s2], axis=0), p_ref[...],
                 preferred_element_type=jnp.float32)         # (2*Bt, C)
    mean = gs[:Bt] * inv_n                                   # (Bt, C)
    var = jnp.maximum(gs[Bt:] * inv_n - mean * mean, 0.0)    # E[y^2] - mean^2
    scale = lax.rsqrt(var + jnp.float32(eps)) * gamma_ref[...]   # (Bt, C)
    shift = beta_ref[...] - mean * scale                         # (Bt, C)
    z = y * scale[:, None, :] + shift[:, None, :]            # normalize + affine (1 FMA pass)

    # ---- Mish, single transcendental: x*tanh(softplus(x)) = x*(e^2+2e)/(e^2+2e+2) ----
    e = jnp.exp(jnp.minimum(z, jnp.float32(20.0)))           # clamp: no f32 overflow
    num = e * (e + jnp.float32(2.0))
    r = num * pl.reciprocal(num + jnp.float32(2.0), approx=True)
    o_ref[...] = jnp.where(z > jnp.float32(20.0), z, z * r).astype(o_ref.dtype)


def conv1d_block(x_ncl, conv_w, conv_b, gn_gamma, gn_beta, *,
                 n_groups=8, eps=1e-5, batch_tile=None):
    """Conv1d(K, padding=K//2) -> GroupNorm(n_groups) -> Mish, fused.

    x_ncl   : (B, Cin, L)  float32   (PyTorch NCL layout)
    conv_w  : (Cout, Cin, K) float32 (PyTorch Conv1d weight)
    conv_b, gn_gamma, gn_beta : (Cout,) float32
    returns : (B, Cout, L) float32
    """
    B, Cin, L = x_ncl.shape
    Cout, Cin2, K = conv_w.shape
    assert Cin2 == Cin
    assert K % 2 == 1, "odd kernel size required (output length == input length)"
    assert Cout % n_groups == 0
    pad = K // 2
    gsize = Cout // n_groups

    C = _round_up(Cout, 128)          # lane-dense output channels
    L_src = L + 2 * pad

    # --- batch tiling: several elements per grid step so DMAs are ~MiB scale ---
    elem_bytes = L_src * Cin * 2 + L * C * x_ncl.dtype.itemsize + 2 * L * C * 4
    Bt = batch_tile or max(1, min(B, (2 << 20) // max(elem_bytes, 1)))
    Bt = min(Bt, max(1, (B + 1) // 2))    # keep grid >= 2 when B >= 2 (v7x: 2 TCs)
    B_pad = -(-B // Bt) * Bt
    grid = (B_pad // Bt,)

    # --- layout prep: channels-last bf16 input, zero-padded along L and batch ---
    x = jnp.pad(jnp.transpose(x_ncl, (0, 2, 1)).astype(jnp.bfloat16),
                ((0, B_pad - B), (pad, pad), (0, 0)))              # (B_pad, L_src, Cin)

    # conv weight as K tap matrices (Cin, C), zero-padded channels, bf16 for the MXU
    w = jnp.pad(jnp.transpose(conv_w, (2, 1, 0)),
                ((0, 0), (0, 0), (0, C - Cout))).astype(jnp.bfloat16)   # (K, Cin, C)
    b2 = jnp.pad(conv_b, (0, C - Cout)).reshape(1, C).astype(jnp.float32)
    g2 = jnp.pad(gn_gamma, (0, C - Cout)).reshape(1, C).astype(jnp.float32)
    be2 = jnp.pad(gn_beta, (0, C - Cout)).reshape(1, C).astype(jnp.float32)

    # same-group indicator; padded channels land in their own dummy groups
    ids = np.arange(C) // gsize
    pmat = jnp.asarray((ids[:, None] == ids[None, :]).astype(np.float32))   # (C, C)

    # VMEM budget: double-buffered x/out tiles + resident weights + f32 temps.
    est = (2 * Bt * L_src * Cin * 2 + 2 * Bt * L * C * x_ncl.dtype.itemsize
           + 2 * K * Cin * C * 2 + 2 * C * C * 4 + 4 * Bt * L * C * 4)
    vmem_limit = int(min(64 * 2 ** 20, max(32 * 2 ** 20, 2 * est)))  # v7x: 64 MiB physical

    kernel = functools.partial(_conv1d_block_kernel, K=K, gsize=gsize, eps=eps)

    y = pl.pallas_call(
        kernel,
        out_shape=jax.ShapeDtypeStruct((B_pad, L, C), x_ncl.dtype),
        grid=grid,
        in_specs=[
            pl.BlockSpec((Bt, L_src, Cin), lambda b: (b, 0, 0)),
            pl.BlockSpec((K, Cin, C), lambda b: (0, 0, 0)),   # resident weights
            pl.BlockSpec((1, C), lambda b: (0, 0)),
            pl.BlockSpec((1, C), lambda b: (0, 0)),
            pl.BlockSpec((1, C), lambda b: (0, 0)),
            pl.BlockSpec((C, C), lambda b: (0, 0)),
        ],
        out_specs=pl.BlockSpec((Bt, L, C), lambda b: (b, 0, 0)),
        compiler_params=pltpu.CompilerParams(
            dimension_semantics=("parallel",),
            vmem_limit_bytes=vmem_limit),
    )(x, w, b2, g2, be2, pmat)

    # drop channel / batch padding, back to the PyTorch NCL layout
    return jnp.transpose(y[:B, :, :Cout], (0, 2, 1))


def _ref_conv1d_block(x, w, b, gamma, beta, n_groups, eps):
    """Pure-numpy reference: Conv1d -> GroupNorm -> Mish (f32)."""
    B, Cin, L = x.shape
    Cout, _, K = w.shape
    pad = K // 2
    xp = np.pad(x, ((0, 0), (0, 0), (pad, pad)))
    y = np.zeros((B, Cout, L), np.float32)
    for l in range(L):
        patch = xp[:, :, l:l + K]                                    # (B, Cin, K)
        y[:, :, l] = np.einsum('bik,oik->bo', patch, w) + b[None, :]
    gs = Cout // n_groups
    yg = y.reshape(B, n_groups, gs, L)
    mean = yg.mean(axis=(2, 3), keepdims=True)
    var = yg.var(axis=(2, 3), keepdims=True)
    yn = ((yg - mean) / np.sqrt(var + eps)).reshape(B, Cout, L)
    yn = yn * gamma[None, :, None] + beta[None, :, None]
    sp = np.log1p(np.exp(-np.abs(yn))) + np.maximum(yn, 0.0)
    return yn * np.tanh(sp)


if __name__ == "__main__":
    B, Cin, Cout, L, K, G = 2, 16, 32, 16, 5, 8

    key = jax.random.PRNGKey(0)
    kx, kw, kb, kg, kbt = jax.random.split(key, 5)
    x = jax.random.normal(kx, (B, Cin, L), dtype=jnp.float32)
    conv_w = jax.random.normal(kw, (Cout, Cin, K), dtype=jnp.float32) * 0.1
    conv_b = jax.random.normal(kb, (Cout,), dtype=jnp.float32) * 0.1
    gamma = 1.0 + 0.1 * jax.random.normal(kg, (Cout,), dtype=jnp.float32)
    beta = 0.1 * jax.random.normal(kbt, (Cout,), dtype=jnp.float32)

    y = conv1d_block(x, conv_w, conv_b, gamma, beta, n_groups=G, eps=1e-5)
    y = jax.block_until_ready(y)

    y_ref = _ref_conv1d_block(np.asarray(x), np.asarray(conv_w), np.asarray(conv_b),
                              np.asarray(gamma), np.asarray(beta), G, 1e-5)
    # tolerance accounts for bf16 MXU operands + approx reciprocal in Mish
    np.testing.assert_allclose(np.asarray(y), y_ref, rtol=5e-2, atol=5e-2)
    assert y.shape == (B, Cout, L)

    print("KERNEL_OK")
</pallas_src>

<mosaic_0001>
module attributes {stable_mosaic.version = 11 : i64} {
  func.func @_conv1d_block_kernel(%arg0: i32, %arg1: memref<1x20x16xbf16, #tpu.memory_space<vmem>>, %arg2: memref<5x16x128xbf16, #tpu.memory_space<vmem>>, %arg3: memref<1x128xf32, #tpu.memory_space<vmem>>, %arg4: memref<1x128xf32, #tpu.memory_space<vmem>>, %arg5: memref<1x128xf32, #tpu.memory_space<vmem>>, %arg6: memref<128x128xf32, #tpu.memory_space<vmem>>, %arg7: memref<1x16x128xf32, #tpu.memory_space<vmem>>) attributes {dimension_semantics = [#tpu.dimension_semantics<parallel>], iteration_bounds = array<i64: 2>, scalar_prefetch = 0 : i64, scratch_operands = 0 : i64, tpu.core_type = #tpu.core_type<tc>, window_params = [{transform_indices = @transform_0, window_bounds = array<i64: 1, 20, 16>}, {pipeline_mode = #tpu.pipeline_mode<synchronous>, transform_indices = @transform_1, window_bounds = array<i64: 5, 16, 128>}, {pipeline_mode = #tpu.pipeline_mode<synchronous>, transform_indices = @transform_2, window_bounds = array<i64: 1, 128>}, {pipeline_mode = #tpu.pipeline_mode<synchronous>, transform_indices = @transform_3, window_bounds = array<i64: 1, 128>}, {pipeline_mode = #tpu.pipeline_mode<synchronous>, transform_indices = @transform_4, window_bounds = array<i64: 1, 128>}, {pipeline_mode = #tpu.pipeline_mode<synchronous>, transform_indices = @transform_5, window_bounds = array<i64: 128, 128>}, {transform_indices = @transform_6, window_bounds = array<i64: 1, 16, 128>}]} {
    %cst = arith.constant 0.000000e+00 : f32
    %0 = vector.broadcast %cst : f32 to vector<16x128xf32>
    %c0 = arith.constant 0 : index
    %c0_0 = arith.constant 0 : index
    %c0_1 = arith.constant 0 : index
    %1 = vector.load %arg1[%c0, %c0_0, %c0_1] : memref<1x20x16xbf16, #tpu.memory_space<vmem>>, vector<1x16x16xbf16>
    %2 = vector.shape_cast %1 : vector<1x16x16xbf16> to vector<16x16xbf16>
    %c0_2 = arith.constant 0 : index
    %c0_3 = arith.constant 0 : index
    %c0_4 = arith.constant 0 : index
    %3 = vector.load %arg2[%c0_2, %c0_3, %c0_4] : memref<5x16x128xbf16, #tpu.memory_space<vmem>>, vector<1x16x128xbf16>
    %4 = vector.shape_cast %3 : vector<1x16x128xbf16> to vector<16x128xbf16>
    %cst_5 = arith.constant dense<0.000000e+00> : vector<16x128xf32>
    %5 = tpu.matmul %2, %4, %cst_5 {dimension_numbers = #tpu.dot_dimension_numbers<[1], [0], [0], [1], [0, 0, 1, 1], [], []>} : vector<16x16xbf16>, vector<16x128xbf16>, vector<16x128xf32> -> vector<16x128xf32>
    %6 = arith.addf %0, %5 : vector<16x128xf32>
    %c0_6 = arith.constant 0 : index
    %c1 = arith.constant 1 : index
    %c0_7 = arith.constant 0 : index
    %7 = vector.load %arg1[%c0_6, %c1, %c0_7] : memref<1x20x16xbf16, #tpu.memory_space<vmem>>, vector<1x16x16xbf16>
    %8 = vector.shape_cast %7 : vector<1x16x16xbf16> to vector<16x16xbf16>
    %c1_8 = arith.constant 1 : index
    %c0_9 = arith.constant 0 : index
    %c0_10 = arith.constant 0 : index
    %9 = vector.load %arg2[%c1_8, %c0_9, %c0_10] : memref<5x16x128xbf16, #tpu.memory_space<vmem>>, vector<1x16x128xbf16>
    %10 = vector.shape_cast %9 : vector<1x16x128xbf16> to vector<16x128xbf16>
    %cst_11 = arith.constant dense<0.000000e+00> : vector<16x128xf32>
    %11 = tpu.matmul %8, %10, %cst_11 {dimension_numbers = #tpu.dot_dimension_numbers<[1], [0], [0], [1], [0, 0, 1, 1], [], []>} : vector<16x16xbf16>, vector<16x128xbf16>, vector<16x128xf32> -> vector<16x128xf32>
    %12 = arith.addf %6, %11 : vector<16x128xf32>
    %c0_12 = arith.constant 0 : index
    %c2 = arith.constant 2 : index
    %c0_13 = arith.constant 0 : index
    %13 = vector.load %arg1[%c0_12, %c2, %c0_13] : memref<1x20x16xbf16, #tpu.memory_space<vmem>>, vector<1x16x16xbf16>
    %14 = vector.shape_cast %13 : vector<1x16x16xbf16> to vector<16x16xbf16>
    %c2_14 = arith.constant 2 : index
    %c0_15 = arith.constant 0 : index
    %c0_16 = arith.constant 0 : index
    %15 = vector.load %arg2[%c2_14, %c0_15, %c0_16] : memref<5x16x128xbf16, #tpu.memory_space<vmem>>, vector<1x16x128xbf16>
    %16 = vector.shape_cast %15 : vector<1x16x128xbf16> to vector<16x128xbf16>
    %cst_17 = arith.constant dense<0.000000e+00> : vector<16x128xf32>
    %17 = tpu.matmul %14, %16, %cst_17 {dimension_numbers = #tpu.dot_dimension_numbers<[1], [0], [0], [1], [0, 0, 1, 1], [], []>} : vector<16x16xbf16>, vector<16x128xbf16>, vector<16x128xf32> -> vector<16x128xf32>
    %18 = arith.addf %12, %17 : vector<16x128xf32>
    %c0_18 = arith.constant 0 : index
    %c3 = arith.constant 3 : index
    %c0_19 = arith.constant 0 : index
    %19 = vector.load %arg1[%c0_18, %c3, %c0_19] : memref<1x20x16xbf16, #tpu.memory_space<vmem>>, vector<1x16x16xbf16>
    %20 = vector.shape_cast %19 : vector<1x16x16xbf16> to vector<16x16xbf16>
    %c3_20 = arith.constant 3 : index
    %c0_21 = arith.constant 0 : index
    %c0_22 = arith.constant 0 : index
    %21 = vector.load %arg2[%c3_20, %c0_21, %c0_22] : memref<5x16x128xbf16, #tpu.memory_space<vmem>>, vector<1x16x128xbf16>
    %22 = vector.shape_cast %21 : vector<1x16x128xbf16> to vector<16x128xbf16>
    %cst_23 = arith.constant dense<0.000000e+00> : vector<16x128xf32>
    %23 = tpu.matmul %20, %22, %cst_23 {dimension_numbers = #tpu.dot_dimension_numbers<[1], [0], [0], [1], [0, 0, 1, 1], [], []>} : vector<16x16xbf16>, vector<16x128xbf16>, vector<16x128xf32> -> vector<16x128xf32>
    %24 = arith.addf %18, %23 : vector<16x128xf32>
    %c0_24 = arith.constant 0 : index
    %c4 = arith.constant 4 : index
    %c0_25 = arith.constant 0 : index
    %25 = vector.load %arg1[%c0_24, %c4, %c0_25] : memref<1x20x16xbf16, #tpu.memory_space<vmem>>, vector<1x16x16xbf16>
    %26 = vector.shape_cast %25 : vector<1x16x16xbf16> to vector<16x16xbf16>
    %c4_26 = arith.constant 4 : index
    %c0_27 = arith.constant 0 : index
    %c0_28 = arith.constant 0 : index
    %27 = vector.load %arg2[%c4_26, %c0_27, %c0_28] : memref<5x16x128xbf16, #tpu.memory_space<vmem>>, vector<1x16x128xbf16>
    %28 = vector.shape_cast %27 : vector<1x16x128xbf16> to vector<16x128xbf16>
    %cst_29 = arith.constant dense<0.000000e+00> : vector<16x128xf32>
    %29 = tpu.matmul %26, %28, %cst_29 {dimension_numbers = #tpu.dot_dimension_numbers<[1], [0], [0], [1], [0, 0, 1, 1], [], []>} : vector<16x16xbf16>, vector<16x128xbf16>, vector<16x128xf32> -> vector<16x128xf32>
    %30 = arith.addf %24, %29 : vector<16x128xf32>
    %c0_30 = arith.constant 0 : index
    %c0_31 = arith.constant 0 : index
    %31 = vector.load %arg3[%c0_30, %c0_31] : memref<1x128xf32, #tpu.memory_space<vmem>>, vector<1x128xf32>
    %32 = vector.broadcast %31 : vector<1x128xf32> to vector<16x128xf32>
    %33 = arith.addf %30, %32 : vector<16x128xf32>
    %34 = vector.shape_cast %33 : vector<16x128xf32> to vector<1x16x128xf32>
    %cst_32 = arith.constant dense<0.000000e+00> : vector<1x128xf32>
    %35 = vector.multi_reduction <add>, %34, %cst_32 [1] : vector<1x16x128xf32> to vector<1x128xf32>
    %36 = arith.mulf %34, %34 : vector<1x16x128xf32>
    %cst_33 = arith.constant dense<0.000000e+00> : vector<1x128xf32>
    %37 = vector.multi_reduction <add>, %36, %cst_33 [1] : vector<1x16x128xf32> to vector<1x128xf32>
    %38 = tpu.concatenate %35, %37 in 0 : vector<1x128xf32>, vector<1x128xf32> -> vector<2x128xf32>
    %c0_34 = arith.constant 0 : index
    %c0_35 = arith.constant 0 : index
    %39 = vector.load %arg6[%c0_34, %c0_35] : memref<128x128xf32, #tpu.memory_space<vmem>>, vector<128x128xf32>
    %cst_36 = arith.constant dense<0.000000e+00> : vector<2x128xf32>
    %40 = tpu.matmul %38, %39, %cst_36 {dimension_numbers = #tpu.dot_dimension_numbers<[1], [0], [0], [1], [0, 0, 1, 1], [], []>} : vector<2x128xf32>, vector<128x128xf32>, vector<2x128xf32> -> vector<2x128xf32>
    %41 = vector.extract_strided_slice %40 {offsets = [0, 0], sizes = [1, 128], strides = [1, 1]} : vector<2x128xf32> to vector<1x128xf32>
    %cst_37 = arith.constant 1.562500e-02 : f32
    %42 = vector.broadcast %cst_37 : f32 to vector<1x128xf32>
    %43 = arith.mulf %41, %42 : vector<1x128xf32>
    %44 = vector.extract_strided_slice %40 {offsets = [1, 0], sizes = [1, 128], strides = [1, 1]} : vector<2x128xf32> to vector<1x128xf32>
    %cst_38 = arith.constant 1.562500e-02 : f32
    %45 = vector.broadcast %cst_38 : f32 to vector<1x128xf32>
    %46 = arith.mulf %44, %45 : vector<1x128xf32>
    %47 = arith.mulf %43, %43 : vector<1x128xf32>
    %48 = arith.subf %46, %47 : vector<1x128xf32>
    %cst_39 = arith.constant 0.000000e+00 : f32
    %49 = vector.broadcast %cst_39 : f32 to vector<1x128xf32>
    %50 = arith.maximumf %48, %49 : vector<1x128xf32>
    %cst_40 = arith.constant 9.99999974E-6 : f32
    %51 = vector.broadcast %cst_40 : f32 to vector<1x128xf32>
    %52 = arith.addf %50, %51 : vector<1x128xf32>
    %53 = math.rsqrt %52 : vector<1x128xf32>
    %c0_41 = arith.constant 0 : index
    %c0_42 = arith.constant 0 : index
    %54 = vector.load %arg4[%c0_41, %c0_42] : memref<1x128xf32, #tpu.memory_space<vmem>>, vector<1x128xf32>
    %55 = arith.mulf %53, %54 : vector<1x128xf32>
    %c0_43 = arith.constant 0 : index
    %c0_44 = arith.constant 0 : index
    %56 = vector.load %arg5[%c0_43, %c0_44] : memref<1x128xf32, #tpu.memory_space<vmem>>, vector<1x128xf32>
    %57 = arith.mulf %43, %55 : vector<1x128xf32>
    %58 = arith.subf %56, %57 : vector<1x128xf32>
    %59 = vector.shape_cast %55 : vector<1x128xf32> to vector<1x1x128xf32>
    %60 = vector.broadcast %59 : vector<1x1x128xf32> to vector<1x16x128xf32>
    %61 = arith.mulf %34, %60 : vector<1x16x128xf32>
    %62 = vector.shape_cast %58 : vector<1x128xf32> to vector<1x1x128xf32>
    %63 = vector.broadcast %62 : vector<1x1x128xf32> to vector<1x16x128xf32>
    %64 = arith.addf %61, %63 : vector<1x16x128xf32>
    %cst_45 = arith.constant 2.000000e+01 : f32
    %65 = vector.broadcast %cst_45 : f32 to vector<1x16x128xf32>
    %66 = arith.minimumf %64, %65 : vector<1x16x128xf32>
    %67 = math.exp %66 : vector<1x16x128xf32>
    %cst_46 = arith.constant 2.000000e+00 : f32
    %68 = vector.broadcast %cst_46 : f32 to vector<1x16x128xf32>
    %69 = arith.addf %67, %68 : vector<1x16x128xf32>
    %70 = arith.mulf %67, %69 : vector<1x16x128xf32>
    %cst_47 = arith.constant 2.000000e+00 : f32
    %71 = vector.broadcast %cst_47 : f32 to vector<1x16x128xf32>
    %72 = arith.addf %70, %71 : vector<1x16x128xf32>
    %73 = tpu.reciprocal %72 {approx = true} : vector<1x16x128xf32> -> vector<1x16x128xf32>
    %74 = arith.mulf %70, %73 : vector<1x16x128xf32>
    %cst_48 = arith.constant 2.000000e+01 : f32
    %75 = vector.broadcast %cst_48 : f32 to vector<1x16x128xf32>
    %76 = arith.cmpf ogt, %64, %75 : vector<1x16x128xf32>
    %77 = arith.mulf %64, %74 : vector<1x16x128xf32>
    %78 = arith.select %76, %64, %77 : vector<1x16x128xi1>, vector<1x16x128xf32>
    %c0_49 = arith.constant 0 : index
    %c0_50 = arith.constant 0 : index
    %c0_51 = arith.constant 0 : index
    %79 = vector.load %arg7[%c0_49, %c0_50, %c0_51] : memref<1x16x128xf32, #tpu.memory_space<vmem>>, vector<1x16x128xf32>
    tpu.vector_store %arg7[%c0_49, %c0_50, %c0_51], %78 {strides = array<i32>} : memref<1x16x128xf32, #tpu.memory_space<vmem>>, vector<1x16x128xf32>,
    return
  }
  func.func @transform_0(%arg0: i32) -> (i32, i32, i32) {
    %c0_i32 = arith.constant 0 : i32
    %c0_i32_0 = arith.constant 0 : i32
    %c0_i32_1 = arith.constant 0 : i32
    return %arg0, %c0_i32, %c0_i32_0 : i32, i32, i32
  }
  func.func @transform_1(%arg0: i32) -> (i32, i32, i32) {
    %c0_i32 = arith.constant 0 : i32
    %c0_i32_0 = arith.constant 0 : i32
    %c0_i32_1 = arith.constant 0 : i32
    %c0_i32_2 = arith.constant 0 : i32
    return %c0_i32, %c0_i32_0, %c0_i32_1 : i32, i32, i32
  }
  func.func @transform_2(%arg0: i32) -> (i32, i32) {
    %c0_i32 = arith.constant 0 : i32
    %c0_i32_0 = arith.constant 0 : i32
    %c0_i32_1 = arith.constant 0 : i32
    return %c0_i32, %c0_i32_0 : i32, i32
  }
  func.func @transform_3(%arg0: i32) -> (i32, i32) {
    %c0_i32 = arith.constant 0 : i32
    %c0_i32_0 = arith.constant 0 : i32
    %c0_i32_1 = arith.constant 0 : i32
    return %c0_i32, %c0_i32_0 : i32, i32
  }
  func.func @transform_4(%arg0: i32) -> (i32, i32) {
    %c0_i32 = arith.constant 0 : i32
    %c0_i32_0 = arith.constant 0 : i32
    %c0_i32_1 = arith.constant 0 : i32
    return %c0_i32, %c0_i32_0 : i32, i32
  }
  func.func @transform_5(%arg0: i32) -> (i32, i32) {
    %c0_i32 = arith.constant 0 : i32
    %c0_i32_0 = arith.constant 0 : i32
    %c0_i32_1 = arith.constant 0 : i32
    return %c0_i32, %c0_i32_0 : i32, i32
  }
  func.func @transform_6(%arg0: i32) -> (i32, i32, i32) {
    %c0_i32 = arith.constant 0 : i32
    %c0_i32_0 = arith.constant 0 : i32
    %c0_i32_1 = arith.constant 0 : i32
    return %arg0, %c0_i32, %c0_i32_0 : i32, i32, i32
  }
}

</mosaic_0001>

<llo_original>
// kernel: tpu_custom_call.1
$region0: #{tpu_custom_call.1}
  #allocation0 [shape = 'u32[]', space=smem, size = 0x4, offset = 0x4, fixed_abs, tag = 'smem constant byte address 0x4 - core index']
  #allocation1 [shape = 'u32[144,128]{1,0:T(1,128)}', space=vmem, size = 0x12000, scoped, tag = 'internal scratch']
  %s0 = inlined_call_operand.vmem [shape: bf16[2,20,16], index: 0, kind: input, shape index: {}]
  %s1 = inlined_call_operand.vmem [shape: bf16[5,16,128], index: 1, kind: input, shape index: {}]
  %s2 = inlined_call_operand.vmem [shape: f32[1,128], index: 2, kind: input, shape index: {}]
  %s3 = inlined_call_operand.vmem [shape: f32[1,128], index: 3, kind: input, shape index: {}]
  %s4 = inlined_call_operand.vmem [shape: f32[1,128], index: 4, kind: input, shape index: {}]
  %s5 = inlined_call_operand.hbm [shape: f32[128,128], index: 5, kind: input, shape index: {}]
  %s6 = inlined_call_operand.hbm [shape: f32[2,16,128], index: 6, kind: output, shape index: {}]
  %s7 = sld [smem:[#allocation0]]
  $region61: #{tpu_custom_call.1} parent=0
    _
  %s9 = ssub.s32 1, %s7
  %s10 = scalar_select 0, %s9, %s7
  $region1: #{tpu_custom_call.1} parent=0
    #allocation2 [shape = 'u8[65536]{0}', space=vmem, size = 0x10000, scoped, tag = 'input window, operand 5, single buffered']
    #allocation3 [shape = 's32[2]{0}', space=sflag, size = 0x8, scoped, tag = 'scoped memory for tpu_custom_call.1']
    #allocation4 [shape = 's32[2]{0}', space=sflag, size = 0x8, scoped, tag = 'scoped memory for tpu_custom_call.1']
    #allocation5 [shape = 'u8[16384]{0}', space=vmem, size = 0x4000, scoped, tag = 'output window, operand 0']
    %11 = vsyncpa [#allocation3], 0
    %12 = vsyncpa [#allocation4], 0
    %s13 = scalar_lea.sflag [#allocation4], 1
    %14 = vsyncpa %s13, 0
    loop: start=0, step=1, limit=4
    $region2: #{tpu_custom_call.1} parent=1 // loop_pre_header
      _
    $region3: #{tpu_custom_call.1} parent=1 // loop_header
      %s16 = sphi 0, %s20
      %p17 = scmp.ge.s32.totalorder %s16, 4
      %s26 = sphi 0, %s28
      %s29 = sphi 0, %s26
      %s30 = sphi 0, %s29
      %s46 = sphi 0, %s30
      %s50 = sphi 0, %s50
      %s52 = sphi 0, %s50
      %s53 = sphi 0, %s52
      %s67 = sphi 0, %s53
      %s71 = sphi 0, %s71
      %s73 = sphi 0, %s71
      %s74 = sphi 0, %s73
      %s88 = sphi 0, %s74
      %s92 = sphi 0, %s92
      %s94 = sphi 0, %s92
      %s95 = sphi 0, %s94
      %s109 = sphi 0, %s95
      %s113 = sphi 0, %s113
      %s115 = sphi 0, %s113
      %s116 = sphi 0, %s115
      %s130 = sphi 0, %s116
      %s134 = sphi 0, %s134
      %s136 = sphi 0, %s134
      %s137 = sphi 0, %s136
      %s151 = sphi 0, %s137
      %s157 = sphi 0, %s159
      %s160 = sphi 0, %s157
      %s161 = sphi 0, %s160
      %s177 = sphi 0, %s161
    $region4: #{tpu_custom_call.1} parent=1 // loop_header_branch
      %19 = sbr.rel (%p17) target = $region8
    $region5: #{tpu_custom_call.1} parent=1 // loop_body
      %s21 = ssub.s32 %s16, 1
      %s22 = ssub.s32 %s16, 2
      %s23 = sadd.s32 %s16, 1
      %s24 = ssub.s32 %s16, %s23
      %p25 = scmp.eq.s32.totalorder %s24, 0
      %s27 = sadd.s32 %s26, 1
      %s28 = scalar_select %p25, %s26, %s27
      %p31 = pneg %p25
      %p32 = scmp.eq.s32.totalorder %s16, 1
      %p33 = por %p31, %p32
      %p34 = scmp.ne.s32.totalorder %s26, %s29
      %p35 = scmp.eq.s32.totalorder %s16, 0
      %p36 = por %p34, %p35
      %p37 = scmp.ne.s32.totalorder %s26, %s29
      %p38 = scmp.eq.s32.totalorder %s21, 1
      %p39 = por %p37, %p38
      %p40 = scmp.ne.s32.totalorder %s29, %s30
      %p41 = scmp.eq.s32.totalorder %s21, 0
      %p42 = por %p40, %p41
      %p43 = scmp.ne.s32.totalorder %s29, %s30
      %p44 = scmp.eq.s32.totalorder %s22, 1
      %p45 = por %p43, %p44
      %p47 = scmp.ne.s32.totalorder %s30, %s46
      %p48 = scmp.eq.s32.totalorder %s22, 0
      %p49 = por %p47, %p48
      %s51 = sadd.s32 %s50, 1
      %p54 = scmp.eq.s32.totalorder %s16, 1
      %p55 = scmp.ne.s32.totalorder %s50, %s52
      %p56 = scmp.eq.s32.totalorder %s16, 0
      %p57 = por %p55, %p56
      %p58 = scmp.ne.s32.totalorder %s50, %s52
      %p59 = scmp.eq.s32.totalorder %s21, 1
      %p60 = por %p58, %p59
      %p61 = scmp.ne.s32.totalorder %s52, %s53
      %p62 = scmp.eq.s32.totalorder %s21, 0
      %p63 = por %p61, %p62
      %p64 = scmp.ne.s32.totalorder %s52, %s53
      %p65 = scmp.eq.s32.totalorder %s22, 1
      %p66 = por %p64, %p65
      %p68 = scmp.ne.s32.totalorder %s53, %s67
      %p69 = scmp.eq.s32.totalorder %s22, 0
      %p70 = por %p68, %p69
      %s72 = sadd.s32 %s71, 1
      %p75 = scmp.eq.s32.totalorder %s16, 1
      %p76 = scmp.ne.s32.totalorder %s71, %s73
      %p77 = scmp.eq.s32.totalorder %s16, 0
      %p78 = por %p76, %p77
      %p79 = scmp.ne.s32.totalorder %s71, %s73
      %p80 = scmp.eq.s32.totalorder %s21, 1
      %p81 = por %p79, %p80
      %p82 = scmp.ne.s32.totalorder %s73, %s74
      %p83 = scmp.eq.s32.totalorder %s21, 0
      %p84 = por %p82, %p83
      %p85 = scmp.ne.s32.totalorder %s73, %s74
      %p86 = scmp.eq.s32.totalorder %s22, 1
      %p87 = por %p85, %p86
      %p89 = scmp.ne.s32.totalorder %s74, %s88
      %p90 = scmp.eq.s32.totalorder %s22, 0
      %p91 = por %p89, %p90
      %s93 = sadd.s32 %s92, 1
      %p96 = scmp.eq.s32.totalorder %s16, 1
      %p97 = scmp.ne.s32.totalorder %s92, %s94
      %p98 = scmp.eq.s32.totalorder %s16, 0
      %p99 = por %p97, %p98
      %p100 = scmp.ne.s32.totalorder %s92, %s94
      %p101 = scmp.eq.s32.totalorder %s21, 1
      %p102 = por %p100, %p101
      %p103 = scmp.ne.s32.totalorder %s94, %s95
      %p104 = scmp.eq.s32.totalorder %s21, 0
      %p105 = por %p103, %p104
      %p106 = scmp.ne.s32.totalorder %s94, %s95
      %p107 = scmp.eq.s32.totalorder %s22, 1
      %p108 = por %p106, %p107
      %p110 = scmp.ne.s32.totalorder %s95, %s109
      %p111 = scmp.eq.s32.totalorder %s22, 0
      %p112 = por %p110, %p111
      %s114 = sadd.s32 %s113, 1
      %p117 = scmp.eq.s32.totalorder %s16, 1
      %p118 = scmp.ne.s32.totalorder %s113, %s115
      %p119 = scmp.eq.s32.totalorder %s16, 0
      %p120 = por %p118, %p119
      %p121 = scmp.ne.s32.totalorder %s113, %s115
      %p122 = scmp.eq.s32.totalorder %s21, 1
      %p123 = por %p121, %p122
      %p124 = scmp.ne.s32.totalorder %s115, %s116
      %p125 = scmp.eq.s32.totalorder %s21, 0
      %p126 = por %p124, %p125
      %p127 = scmp.ne.s32.totalorder %s115, %s116
      %p128 = scmp.eq.s32.totalorder %s22, 1
      %p129 = por %p127, %p128
      %p131 = scmp.ne.s32.totalorder %s116, %s130
      %p132 = scmp.eq.s32.totalorder %s22, 0
      %p133 = por %p131, %p132
      %s135 = sadd.s32 %s134, 1
      %p138 = scmp.eq.s32.totalorder %s16, 1
      %p139 = scmp.ne.s32.totalorder %s134, %s136
      %p140 = scmp.eq.s32.totalorder %s16, 0
      %p141 = por %p139, %p140
      %p142 = scmp.ne.s32.totalorder %s134, %s136
      %p143 = scmp.eq.s32.totalorder %s21, 1
      %p144 = por %p142, %p143
      %p145 = scmp.ne.s32.totalorder %s136, %s137
      %p146 = scmp.eq.s32.totalorder %s21, 0
      %p147 = por %p145, %p146
      %p148 = scmp.ne.s32.totalorder %s136, %s137
      %p149 = scmp.eq.s32.totalorder %s22, 1
      %p150 = por %p148, %p149
      %p152 = scmp.ne.s32.totalorder %s137, %s151
      %p153 = scmp.eq.s32.totalorder %s22, 0
      %p154 = por %p152, %p153
      %s155 = ssub.s32 %s16, %s23
      %p156 = scmp.eq.s32.totalorder %s155, 0
      %s158 = sadd.s32 %s157, 1
      %s159 = scalar_select %p156, %s157, %s158
      %p162 = pneg %p156
      %p163 = scmp.eq.s32.totalorder %s16, 1
      %p164 = por %p162, %p163
      %p165 = scmp.ne.s32.totalorder %s157, %s160
      %p166 = scmp.eq.s32.totalorder %s16, 0
      %p167 = por %p165, %p166
      %p168 = scmp.ne.s32.totalorder %s157, %s160
      %p169 = scmp.eq.s32.totalorder %s21, 1
      %p170 = por %p168, %p169
      %p171 = scmp.ne.s32.totalorder %s160, %s161
      %p172 = scmp.eq.s32.totalorder %s21, 0
      %p173 = por %p171, %p172
      %p174 = scmp.ne.s32.totalorder %s160, %s161
      %p175 = scmp.eq.s32.totalorder %s22, 1
      %p176 = por %p174, %p175
      %p178 = scmp.ne.s32.totalorder %s161, %s177
      %p179 = scmp.eq.s32.totalorder %s22, 0
      %p180 = por %p178, %p179
      %p181 = scmp.le.s32.totalorder 1, %s16
      %p182 = scmp.lt.s32.totalorder %s16, 3
      %p183 = pnand %p181, %p182
      %p184 = pneg %p183
      // Predicated region
      $region9: #{tpu_custom_call.1} parent=5 // pred_check
        _
      $region10: #{tpu_custom_call.1} parent=5 // pred_check_branch
        %186 = sbr.rel (%p183) target = $region12
      $region11: #{tpu_custom_call.1} parent=5 // pred_region
        %s187 = ssub.s32 %s16, 1
        // Predicated region
        $region13: #{tpu_custom_call.1} parent=11 // pred_check
          %p188 = pneg %p63
        $region14: #{tpu_custom_call.1} parent=11 // pred_check_branch
          %190 = sbr.rel (%p188) target = $region16
        $region15: #{tpu_custom_call.1} parent=11 // pred_region
          _
        $region16: #{tpu_custom_call.1} parent=11 // pred_fallthru
          _
        // Predicated region
        $region17: #{tpu_custom_call.1} parent=11 // pred_check
          %p191 = pneg %p84
        $region18: #{tpu_custom_call.1} parent=11 // pred_check_branch
          %193 = sbr.rel (%p191) target = $region20
        $region19: #{tpu_custom_call.1} parent=11 // pred_region
          _
        $region20: #{tpu_custom_call.1} parent=11 // pred_fallthru
          _
        // Predicated region
        $region21: #{tpu_custom_call.1} parent=11 // pred_check
          %p194 = pneg %p105
        $region22: #{tpu_custom_call.1} parent=11 // pred_check_branch
          %196 = sbr.rel (%p194) target = $region24
        $region23: #{tpu_custom_call.1} parent=11 // pred_region
          _
        $region24: #{tpu_custom_call.1} parent=11 // pred_fallthru
          _
        // Predicated region
        $region25: #{tpu_custom_call.1} parent=11 // pred_check
          %p197 = pneg %p126
        $region26: #{tpu_custom_call.1} parent=11 // pred_check_branch
          %199 = sbr.rel (%p197) target = $region28
        $region27: #{tpu_custom_call.1} parent=11 // pred_region
          _
        $region28: #{tpu_custom_call.1} parent=11 // pred_fallthru
          _
        // Predicated region
        $region29: #{tpu_custom_call.1} parent=11 // pred_check
          %p200 = pneg %p147
        $region30: #{tpu_custom_call.1} parent=11 // pred_check_branch
          %202 = sbr.rel (%p200) target = $region32
        $region31: #{tpu_custom_call.1} parent=11 // pred_region
          %s204 = ssub.s32 2048, 2048
          %205 = vsyncadd [#allocation3], %s204
          %s206 = sshll.u32 [#allocation2], 4
          %s207 = int_to_ptr.vmem [resolvable:$true] %s206
          %212 = dma.hbm_to_vmem [thread:$0]  %s5, 2048, %s207, [#allocation3], 128, 128, 8
        $region32: #{tpu_custom_call.1} parent=11 // pred_fallthru
          _
      $region12: #{tpu_custom_call.1} parent=5 // pred_fallthru
        _
      %p213 = scmp.lt.s32.totalorder %s16, 2
      // Predicated region
      $region33: #{tpu_custom_call.1} parent=5 // pred_check
        %p214 = pneg %p213
      $region34: #{tpu_custom_call.1} parent=5 // pred_check_branch
        %216 = sbr.rel (%p214) target = $region36
      $region35: #{tpu_custom_call.1} parent=5 // pred_region
        // Predicated region
        $region37: #{tpu_custom_call.1} parent=35 // pred_check
          %p217 = pneg %p36
        $region38: #{tpu_custom_call.1} parent=35 // pred_check_branch
          %219 = sbr.rel (%p217) target = $region40
        $region39: #{tpu_custom_call.1} parent=35 // pred_region
          %p220 = scmp.lt.s32.totalorder %s16, 1
          %s221 = scalar_select %p220, %s16, 1
          %s222 = smul.addr %s221, 3
          %s223 = smul.addr %s222, 4
          %s224 = scalar_lea.vmem %s0, %s223
        $region40: #{tpu_custom_call.1} parent=35 // pred_fallthru
          _
      $region36: #{tpu_custom_call.1} parent=5 // pred_fallthru
        _
      %p225 = scmp.le.s32.totalorder 1, %s16
      %p226 = scmp.lt.s32.totalorder %s16, 3
      %p227 = pnand %p225, %p226
      %p228 = pneg %p227
      // Predicated region
      $region41: #{tpu_custom_call.1} parent=5 // pred_check
        _
      $region42: #{tpu_custom_call.1} parent=5 // pred_check_branch
        %230 = sbr.rel (%p227) target = $region44
      $region43: #{tpu_custom_call.1} parent=5 // pred_region
        %s231 = ssub.s32 %s16, 1
        // Predicated region
        $region45: #{tpu_custom_call.1} parent=43 // pred_check
          %p232 = pneg %p147
        $region46: #{tpu_custom_call.1} parent=43 // pred_check_branch
          %234 = sbr.rel (%p232) target = $region48
        $region47: #{tpu_custom_call.1} parent=43 // pred_region
          %235 = dma.done [#allocation3], 2048
        $region48: #{tpu_custom_call.1} parent=43 // pred_fallthru
          _
        %p236 = scmp.lt.s32.totalorder %s21, 1
        %s237 = scalar_select %p236, %s21, 1
        %s238 = smul.addr %s237, 3
        %s239 = smul.addr %s238, 4
        %s240 = scalar_lea.vmem %s0, %s239
        %p241 = pneg %p42
        %p242 = pneg %p39
        %p243 = pneg %p63
        %p244 = pneg %p60
        %p245 = pneg %p84
        %p246 = pneg %p81
        %p247 = pneg %p105
        %p248 = pneg %p102
        %p249 = pneg %p126
        %p250 = pneg %p123
        %p251 = pneg %p147
        %p252 = pneg %p144
        %p253 = pneg %p173
        %p254 = pneg %p170
        %s255 = sand.u32 %s160, 1
        %s256 = scalar_lea.sflag [#allocation4], %s255
        %s257 = sand.u32 %s160, 1
        %s258 = smul.addr %s257, 16
        %s259 = scalar_lea.vmem [#allocation5], %s258
        %p260 = scmp.lt.s32.totalorder %s21, 1
        %s261 = scalar_select %p260, %s21, 1
        %s262 = smul.addr %s261, 3
        %s263 = smul.addr %s262, 4
        %s264 = scalar_lea.vmem %s0, %s263
        %v266 = vld [vmem:[%s264] sm:$0xf]
        %v267 = vld [vmem:[%s264 + $0x4] sm:$0xf]
        %v268 = vld [vmem:[%s1] sm:$0xf]
        %v269 = vld [vmem:[%s1 + $0x4] sm:$0xf]
        %v270 = vld [vmem:[%s264 + $0x8] sm:$0x1]
        %s271 = scalar_lea.vmem %s1, 8
        %v272 = vld [vmem:[%s271] sm:$0xf]
        %v273 = vld [vmem:[%s271 + $0x4] sm:$0xf]
        %v277 = vunpack.c.l.b16 %v266
        %v278 = vunpack.c.l.b16 %v267
        %v279 = vunpack.c.l.b16 %v270
        %v280 = vpack.c.b16 %v278, %v277
        %v281 = vpack.c.b16 %v279, %v279
        %vm282 = vsmask.f32 7424
        %v284 = vshrl.u32 %v280, 16
        %v286 = vshll.u32 %v280, 16
        %v288 = vrot.slane %v286, 1
        %v289 = vor.u32 %v284, %v288
        %v291 = vshll.u32 %v281, 16
        %v293 = vrot.slane %v291, 1
        %v294 = vsel %vm282, %v289, %v293
        %v297 = vunpack.c.l.b16 %v272
        %v298 = vunpack.c.l.b16 %v273
        %v299 = vpack.c.b16 %v298, %v297
        %vm301 = vcmask 130048
        %v303 = vsel %vm301, %v294, 0
        %305 = vmatprep.subr.bf16.mxu0 0
        %306 = vmatpush1.bf16.msra.mxu0 %v299
        %307 = vmatprep.subr.bf16.mxu0 0
        %308 = vmatpush1.bf16.msra.mxu0 0
        %309 = vmatprep.subr.bf16.mxu0 0
        %310 = vmatpush1.bf16.msra.mxu0 0
        %311 = vmatprep.subr.bf16.mxu0 0
        %312 = vmatpush1.bf16.msra.mxu0 0
        %313 = vmatprep.subr.bf16.mxu0 0
        %314 = vmatpush1.bf16.msra.mxu0 0
        %315 = vmatprep.subr.bf16.mxu0 0
        %316 = vmatpush1.bf16.msra.mxu0 0
        %317 = vmatprep.subr.bf16.mxu0 0
        %318 = vmatpush1.bf16.msra.mxu0 0
        %319 = vmatprep.subr.bf16.mxu0 0
        %320 = vmatpush1.bf16.msra.mxu0 0
        %321 = vmatprep.subr.bf16.mxu0 0
        %322 = vmatpush1.bf16.msra.mxu0 0
        %323 = vmatprep.subr.bf16.mxu0 0
        %324 = vmatpush1.bf16.msra.mxu0 0
        %325 = vmatprep.subr.bf16.mxu0 0
        %326 = vmatpush1.bf16.msra.mxu0 0
        %327 = vmatprep.subr.bf16.mxu0 0
        %328 = vmatpush1.bf16.msra.mxu0 0
        %329 = vmatprep.subr.bf16.mxu0 0
        %330 = vmatpush1.bf16.msra.mxu0 0
        %331 = vmatprep.subr.bf16.mxu0 0
        %332 = vmatpush1.bf16.msra.mxu0 0
        %333 = vmatprep.subr.bf16.mxu0 0
        %334 = vmatpush1.bf16.msra.mxu0 0
        %335 = vmatprep.subr.bf16.mxu0 0
        %336 = vmatpush1.bf16.msra.mxu0 0
        %337 = vmatprep.mubr.bf16.mxu0 0
        %338 = vmatmul.mubr.bf16.gmra.mrb[0].mxu0 %v303
        %v339 = vpop.f32.mrb[0].mxu0
        %v340 = vadd.f32 0.0, %v339
        %v341 = vpop.f32.mrb[0].mxu0
        %v342 = vpop.f32.mrb[0].mxu0
        %v343 = vadd.f32 0.0, %v342
        %v344 = vpop.f32.mrb[0].mxu0
        %345 = vdwg.mxu0
        %v348 = vunpack.c.l.b16 %v268
        %v349 = vunpack.c.l.b16 %v269
        %v350 = vpack.c.b16 %v349, %v348
        %v352 = vsel %vm301, %v280, 0
        %354 = vmatprep.subr.bf16.mxu0 0
        %355 = vmatpush1.bf16.msra.mxu0 %v350
        %356 = vmatprep.subr.bf16.mxu0 0
        %357 = vmatpush1.bf16.msra.mxu0 0
        %358 = vmatprep.subr.bf16.mxu0 0
        %359 = vmatpush1.bf16.msra.mxu0 0
        %360 = vmatprep.subr.bf16.mxu0 0
        %361 = vmatpush1.bf16.msra.mxu0 0
        %362 = vmatprep.subr.bf16.mxu0 0
        %363 = vmatpush1.bf16.msra.mxu0 0
        %364 = vmatprep.subr.bf16.mxu0 0
        %365 = vmatpush1.bf16.msra.mxu0 0
        %366 = vmatprep.subr.bf16.mxu0 0
        %367 = vmatpush1.bf16.msra.mxu0 0
        %368 = vmatprep.subr.bf16.mxu0 0
        %369 = vmatpush1.bf16.msra.mxu0 0
        %370 = vmatprep.subr.bf16.mxu0 0
        %371 = vmatpush1.bf16.msra.mxu0 0
        %372 = vmatprep.subr.bf16.mxu0 0
        %373 = vmatpush1.bf16.msra.mxu0 0
        %374 = vmatprep.subr.bf16.mxu0 0
        %375 = vmatpush1.bf16.msra.mxu0 0
        %376 = vmatprep.subr.bf16.mxu0 0
        %377 = vmatpush1.bf16.msra.mxu0 0
        %378 = vmatprep.subr.bf16.mxu0 0
        %379 = vmatpush1.bf16.msra.mxu0 0
        %380 = vmatprep.subr.bf16.mxu0 0
        %381 = vmatpush1.bf16.msra.mxu0 0
        %382 = vmatprep.subr.bf16.mxu0 0
        %383 = vmatpush1.bf16.msra.mxu0 0
        %384 = vmatprep.subr.bf16.mxu0 0
        %385 = vmatpush1.bf16.msra.mxu0 0
        %386 = vmatprep.mubr.bf16.mxu0 0
        %387 = vmatmul.mubr.bf16.gmra.mrb[0].mxu0 %v352
        %v388 = vpop.f32.mrb[0].mxu0
        %v389 = vadd.f32 %v340, %v388
        %v390 = vpop.f32.mrb[0].mxu0
        %v391 = vpop.f32.mrb[0].mxu0
        %v392 = vadd.f32 %v343, %v391
        %v393 = vpop.f32.mrb[0].mxu0
        %394 = vdwg.mxu0
        %v395 = vld [vmem:[%s264] sm:$0xe]
        %s396 = scalar_lea.vmem %s1, 16
        %v397 = vld [vmem:[%s396] sm:$0xf]
        %v398 = vld [vmem:[%s396 + $0x4] sm:$0xf]
        %v400 = vunpack.c.l.b16 %v395
        %v401 = vpack.c.b16 %v278, %v400
        %vm402 = vcmask 1046528
        %v403 = vrot.slane %v401, 1
        %v404 = vrot.slane %v281, 1
        %v405 = vsel %vm402, %v403, %v404
        %v408 = vunpack.c.l.b16 %v397
        %v409 = vunpack.c.l.b16 %v398
        %v410 = vpack.c.b16 %v409, %v408
        %v413 = vsel %vm301, %v405, 0
        %415 = vmatprep.subr.bf16.mxu0 0
        %416 = vmatpush1.bf16.msra.mxu0 %v410
        %417 = vmatprep.subr.bf16.mxu0 0
        %418 = vmatpush1.bf16.msra.mxu0 0
        %419 = vmatprep.subr.bf16.mxu0 0
        %420 = vmatpush1.bf16.msra.mxu0 0
        %421 = vmatprep.subr.bf16.mxu0 0
        %422 = vmatpush1.bf16.msra.mxu0 0
        %423 = vmatprep.subr.bf16.mxu0 0
        %424 = vmatpush1.bf16.msra.mxu0 0
        %425 = vmatprep.subr.bf16.mxu0 0
        %426 = vmatpush1.bf16.msra.mxu0 0
        %427 = vmatprep.subr.bf16.mxu0 0
        %428 = vmatpush1.bf16.msra.mxu0 0
        %429 = vmatprep.subr.bf16.mxu0 0
        %430 = vmatpush1.bf16.msra.mxu0 0
        %431 = vmatprep.subr.bf16.mxu0 0
        %432 = vmatpush1.bf16.msra.mxu0 0
        %433 = vmatprep.subr.bf16.mxu0 0
        %434 = vmatpush1.bf16.msra.mxu0 0
        %435 = vmatprep.subr.bf16.mxu0 0
        %436 = vmatpush1.bf16.msra.mxu0 0
        %437 = vmatprep.subr.bf16.mxu0 0
        %438 = vmatpush1.bf16.msra.mxu0 0
        %439 = vmatprep.subr.bf16.mxu0 0
        %440 = vmatpush1.bf16.msra.mxu0 0
        %441 = vmatprep.subr.bf16.mxu0 0
        %442 = vmatpush1.bf16.msra.mxu0 0
        %443 = vmatprep.subr.bf16.mxu0 0
        %444 = vmatpush1.bf16.msra.mxu0 0
        %445 = vmatprep.subr.bf16.mxu0 0
        %446 = vmatpush1.bf16.msra.mxu0 0
        %447 = vmatprep.mubr.bf16.mxu0 0
        %448 = vmatmul.mubr.bf16.gmra.mrb[0].mxu0 %v413
        %v449 = vpop.f32.mrb[0].mxu0
        %v450 = vadd.f32 0.0, %v449
        %v451 = vpop.f32.mrb[0].mxu0
        %v452 = vpop.f32.mrb[0].mxu0
        %v453 = vadd.f32 0.0, %v452
        %v454 = vpop.f32.mrb[0].mxu0
        %455 = vdwg.mxu0
        %v456 = vadd.f32 %v389, %v450
        %v457 = vadd.f32 %v392, %v453
        %v458 = vld [vmem:[%s264 + $0x8] sm:$0x3]
        %s459 = scalar_lea.vmem %s1, 24
        %v460 = vld [vmem:[%s459] sm:$0xf]
        %v461 = vld [vmem:[%s459 + $0x4] sm:$0xf]
        %v463 = vunpack.c.l.b16 %v458
        %v464 = vpack.c.b16 %v463, %v463
        %vm465 = vsmask.f32 6400
        %v467 = vshrl.u32 %v401, 16
        %v469 = vrot.slane %v467, 1
        %v470 = vshll.u32 %v401, 16
        %v472 = vrot.slane %v470, 2
        %v473 = vor.u32 %v469, %v472
        %v475 = vshrl.u32 %v464, 16
        %v477 = vrot.slane %v475, 1
        %v478 = vshll.u32 %v464, 16
        %v480 = vrot.slane %v478, 2
        %v481 = vor.u32 %v477, %v480
        %v482 = vsel %vm465, %v473, %v481
        %v485 = vunpack.c.l.b16 %v460
        %v486 = vunpack.c.l.b16 %v461
        %v487 = vpack.c.b16 %v486, %v485
        %v490 = vsel %vm301, %v482, 0
        %492 = vmatprep.subr.bf16.mxu0 0
        %493 = vmatpush1.bf16.msra.mxu0 %v487
        %494 = vmatprep.subr.bf16.mxu0 0
        %495 = vmatpush1.bf16.msra.mxu0 0
        %496 = vmatprep.subr.bf16.mxu0 0
        %497 = vmatpush1.bf16.msra.mxu0 0
        %498 = vmatprep.subr.bf16.mxu0 0
        %499 = vmatpush1.bf16.msra.mxu0 0
        %500 = vmatprep.subr.bf16.mxu0 0
        %501 = vmatpush1.bf16.msra.mxu0 0
        %502 = vmatprep.subr.bf16.mxu0 0
        %503 = vmatpush1.bf16.msra.mxu0 0
        %504 = vmatprep.subr.bf16.mxu0 0
        %505 = vmatpush1.bf16.msra.mxu0 0
        %506 = vmatprep.subr.bf16.mxu0 0
        %507 = vmatpush1.bf16.msra.mxu0 0
        %508 = vmatprep.subr.bf16.mxu0 0
        %509 = vmatpush1.bf16.msra.mxu0 0
        %510 = vmatprep.subr.bf16.mxu0 0
        %511 = vmatpush1.bf16.msra.mxu0 0
        %512 = vmatprep.subr.bf16.mxu0 0
        %513 = vmatpush1.bf16.msra.mxu0 0
        %514 = vmatprep.subr.bf16.mxu0 0
        %515 = vmatpush1.bf16.msra.mxu0 0
        %516 = vmatprep.subr.bf16.mxu0 0
        %517 = vmatpush1.bf16.msra.mxu0 0
        %518 = vmatprep.subr.bf16.mxu0 0
        %519 = vmatpush1.bf16.msra.mxu0 0
        %520 = vmatprep.subr.bf16.mxu0 0
        %521 = vmatpush1.bf16.msra.mxu0 0
        %522 = vmatprep.subr.bf16.mxu0 0
        %523 = vmatpush1.bf16.msra.mxu0 0
        %524 = vmatprep.mubr.bf16.mxu0 0
        %525 = vmatmul.mubr.bf16.gmra.mrb[0].mxu0 %v490
        %v526 = vpop.f32.mrb[0].mxu0
        %v527 = vadd.f32 0.0, %v526
        %v528 = vpop.f32.mrb[0].mxu0
        %v529 = vpop.f32.mrb[0].mxu0
        %v530 = vadd.f32 0.0, %v529
        %v531 = vpop.f32.mrb[0].mxu0
        %532 = vdwg.mxu0
        %v533 = vadd.f32 %v456, %v527
        %v534 = vadd.f32 %v457, %v530
        %v535 = vld [vmem:[%s264] sm:$0xc]
        %s536 = scalar_lea.vmem %s1, 32
        %v537 = vld [vmem:[%s536] sm:$0xf]
        %v538 = vld [vmem:[%s536 + $0x4] sm:$0xf]
        %v540 = vunpack.c.l.b16 %v535
        %v541 = vpack.c.b16 %v278, %v540
        %vm542 = vcmask 1045504
        %v543 = vrot.slane %v541, 2
        %v544 = vrot.slane %v464, 2
        %v545 = vsel %vm542, %v543, %v544
        %v548 = vunpack.c.l.b16 %v537
        %v549 = vunpack.c.l.b16 %v538
        %v550 = vpack.c.b16 %v549, %v548
        %v553 = vsel %vm301, %v545, 0
        %555 = vmatprep.subr.bf16.mxu0 0
        %556 = vmatpush1.bf16.msra.mxu0 %v550
        %557 = vmatprep.subr.bf16.mxu0 0
        %558 = vmatpush1.bf16.msra.mxu0 0
        %559 = vmatprep.subr.bf16.mxu0 0
        %560 = vmatpush1.bf16.msra.mxu0 0
        %561 = vmatprep.subr.bf16.mxu0 0
        %562 = vmatpush1.bf16.msra.mxu0 0
        %563 = vmatprep.subr.bf16.mxu0 0
        %564 = vmatpush1.bf16.msra.mxu0 0
        %565 = vmatprep.subr.bf16.mxu0 0
        %566 = vmatpush1.bf16.msra.mxu0 0
        %567 = vmatprep.subr.bf16.mxu0 0
        %568 = vmatpush1.bf16.msra.mxu0 0
        %569 = vmatprep.subr.bf16.mxu0 0
        %570 = vmatpush1.bf16.msra.mxu0 0
        %571 = vmatprep.subr.bf16.mxu0 0
        %572 = vmatpush1.bf16.msra.mxu0 0
        %573 = vmatprep.subr.bf16.mxu0 0
        %574 = vmatpush1.bf16.msra.mxu0 0
        %575 = vmatprep.subr.bf16.mxu0 0
        %576 = vmatpush1.bf16.msra.mxu0 0
        %577 = vmatprep.subr.bf16.mxu0 0
        %578 = vmatpush1.bf16.msra.mxu0 0
        %579 = vmatprep.subr.bf16.mxu0 0
        %580 = vmatpush1.bf16.msra.mxu0 0
        %581 = vmatprep.subr.bf16.mxu0 0
        %582 = vmatpush1.bf16.msra.mxu0 0
        %583 = vmatprep.subr.bf16.mxu0 0
        %584 = vmatpush1.bf16.msra.mxu0 0
        %585 = vmatprep.subr.bf16.mxu0 0
        %586 = vmatpush1.bf16.msra.mxu0 0
        %587 = vmatprep.mubr.bf16.mxu0 0
        %588 = vmatmul.mubr.bf16.gmra.mrb[0].mxu0 %v553
        %v589 = vpop.f32.mrb[0].mxu0
        %v590 = vadd.f32 0.0, %v589
        %v591 = vpop.f32.mrb[0].mxu0
        %v592 = vpop.f32.mrb[0].mxu0
        %v593 = vadd.f32 0.0, %v592
        %v594 = vpop.f32.mrb[0].mxu0
        %595 = vdwg.mxu0
        %v596 = vadd.f32 %v533, %v590
        %v597 = vadd.f32 %v534, %v593
        %v598 = vld [vmem:[%s2] sm:$0x1]
        %v600 = vlaneseq
        %v601 = vshrl.u32 %v600, 7
        %v602 = vsub.s32 0, %v601
        %v603 = vrot.slane %v598, %v602
        %v605 = vadd.f32 %v596, %v603
        %v606 = vadd.f32 %v597, %v603
        %v607 = vadd.f32 %v605, %v606
        %v608 = vrot.slane %v607, 4
        %v609 = vadd.f32 %v607, %v608
        %v610 = vrot.slane %v609, 2
        %v611 = vadd.f32 %v609, %v610
        %v612 = vrot.slane %v611, 1
        %v613 = vadd.f32 %v611, %v612
        %v614 = vmul.f32 %v605, %v605
        %v615 = vmul.f32 %v606, %v606
        %v616 = vadd.f32 %v614, %v615
        %v617 = vrot.slane %v616, 4
        %v618 = vadd.f32 %v616, %v617
        %v619 = vrot.slane %v618, 2
        %v620 = vadd.f32 %v618, %v619
        %v621 = vrot.slane %v620, 1
        %v622 = vadd.f32 %v620, %v621
        %vm623 = vcmask 1040384
        %v624 = vsel %vm623, %v613, %v622
        %v625 = vld [vmem:[#allocation2] sm:$0xff]
        %v626 = vld [vmem:[#allocation2 + $0x8] sm:$0xff]
        %v627 = vld [vmem:[#allocation2 + $0x10] sm:$0xff]
        %v628 = vld [vmem:[#allocation2 + $0x18] sm:$0xff]
        %v629 = vld [vmem:[#allocation2 + $0x20] sm:$0xff]
        %v630 = vld [vmem:[#allocation2 + $0x28] sm:$0xff]
        %v631 = vld [vmem:[#allocation2 + $0x30] sm:$0xff]
        %v632 = vld [vmem:[#allocation2 + $0x38] sm:$0xff]
        %v633 = vld [vmem:[#allocation2 + $0x40] sm:$0xff]
        %v634 = vld [vmem:[#allocation2 + $0x48] sm:$0xff]
        %v635 = vld [vmem:[#allocation2 + $0x50] sm:$0xff]
        %v636 = vld [vmem:[#allocation2 + $0x58] sm:$0xff]
        %v637 = vld [vmem:[#allocation2 + $0x60] sm:$0xff]
        %v638 = vld [vmem:[#allocation2 + $0x68] sm:$0xff]
        %v639 = vld [vmem:[#allocation2 + $0x70] sm:$0xff]
        %v640 = vld [vmem:[#allocation2 + $0x78] sm:$0xff]
        %641 = vmatprep.subr.mxu0 0.0
        %642 = vmatpush1.msra.mxu0 %v625
        %643 = vmatprep.subr.mxu0 0.0
        %644 = vmatpush1.msra.mxu0 %v626
        %645 = vmatprep.subr.mxu0 0.0
        %646 = vmatpush1.msra.mxu0 %v627
        %647 = vmatprep.subr.mxu0 0.0
        %648 = vmatpush1.msra.mxu0 %v628
        %649 = vmatprep.subr.mxu0 0.0
        %650 = vmatpush1.msra.mxu0 %v629
        %651 = vmatprep.subr.mxu0 0.0
        %652 = vmatpush1.msra.mxu0 %v630
        %653 = vmatprep.subr.mxu0 0.0
        %654 = vmatpush1.msra.mxu0 %v631
        %655 = vmatprep.subr.mxu0 0.0
        %656 = vmatpush1.msra.mxu0 %v632
        %657 = vmatprep.subr.mxu0 0.0
        %658 = vmatpush1.msra.mxu0 %v633
        %659 = vmatprep.subr.mxu0 0.0
        %660 = vmatpush1.msra.mxu0 %v634
        %661 = vmatprep.subr.mxu0 0.0
        %662 = vmatpush1.msra.mxu0 %v635
        %663 = vmatprep.subr.mxu0 0.0
        %664 = vmatpush1.msra.mxu0 %v636
        %665 = vmatprep.subr.mxu0 0.0
        %666 = vmatpush1.msra.mxu0 %v637
        %667 = vmatprep.subr.mxu0 0.0
        %668 = vmatpush1.msra.mxu0 %v638
        %669 = vmatprep.subr.mxu0 0.0
        %670 = vmatpush1.msra.mxu0 %v639
        %671 = vmatprep.subr.mxu0 0.0
        %672 = vmatpush1.msra.mxu0 %v640
        %673 = vmatprep.subr.mxu0 0.0
        %674 = vmatpush1.msra.mxu0 0.0
        %675 = vmatprep.subr.mxu0 0.0
        %676 = vmatpush1.msra.mxu0 0.0
        %677 = vmatprep.subr.mxu0 0.0
        %678 = vmatpush1.msra.mxu0 0.0
        %679 = vmatprep.subr.mxu0 0.0
        %680 = vmatpush1.msra.mxu0 0.0
        %681 = vmatprep.subr.mxu0 0.0
        %682 = vmatpush1.msra.mxu0 0.0
        %683 = vmatprep.subr.mxu0 0.0
        %684 = vmatpush1.msra.mxu0 0.0
        %685 = vmatprep.subr.mxu0 0.0
        %686 = vmatpush1.msra.mxu0 0.0
        %687 = vmatprep.subr.mxu0 0.0
        %688 = vmatpush1.msra.mxu0 0.0
        %689 = vmatprep.subr.mxu0 0.0
        %690 = vmatpush1.msra.mxu0 0.0
        %691 = vmatprep.subr.mxu0 0.0
        %692 = vmatpush1.msra.mxu0 0.0
        %693 = vmatprep.subr.mxu0 0.0
        %694 = vmatpush1.msra.mxu0 0.0
        %695 = vmatprep.subr.mxu0 0.0
        %696 = vmatpush1.msra.mxu0 0.0
        %697 = vmatprep.subr.mxu0 0.0
        %698 = vmatpush1.msra.mxu0 0.0
        %699 = vmatprep.subr.mxu0 0.0
        %700 = vmatpush1.msra.mxu0 0.0
        %701 = vmatprep.subr.mxu0 0.0
        %702 = vmatpush1.msra.mxu0 0.0
        %703 = vmatprep.subr.mxu0 0.0
        %704 = vmatpush1.msra.mxu0 0.0
        %705 = vmatprep.mubr.f32.mxu0 0.0
        %706 = vmatmul.mubr.f32.gmra.mrb[0].mxu0 %v624
        %v707 = vpop.f32.mrb[0].mxu0
        %v708 = vadd.f32 0.0, %v707
        %v709 = vpop.f32.mrb[0].mxu0
        %710 = vdwg.mxu0
        %v711 = vmul.f32 %v708, 0.015625
        %v712 = vmul.f32 %v711, %v711
        %v714 = vrot.slane %v712, 7
        %v716 = vsub.f32 %v711, %v714
        %v717 = vmax.f32 %v716, 0.0
        %v718 = vadd.f32 %v717, 1e-05
        %v719 = vrsqrt.pop %v718
        %v720 = vld [vmem:[%s3] sm:$0x1]
        %v722 = vlaneseq
        %v723 = vshrl.u32 %v722, 7
        %v724 = vsub.s32 0, %v723
        %v725 = vrot.slane %v720, %v724
        %v727 = vmul.f32 %v719, %v725
        %v728 = vld [vmem:[%s4] sm:$0x1]
        %v730 = vrot.slane %v727, 1
        %v732 = vmul.f32 %v711, %v730
        %v733 = vsub.f32 %v728, %v732
        %v734 = vlaneseq
        %v735 = vshrl.u32 %v734, 7
        %v736 = vsub.s32 1, %v735
        %v737 = vrot.slane %v727, %v736
        %v738 = vmul.f32 %v605, %v737
        %v739 = vmul.f32 %v606, %v737
        %v741 = vlaneseq
        %v742 = vshrl.u32 %v741, 7
        %v743 = vsub.s32 0, %v742
        %v744 = vrot.slane %v733, %v743
        %v746 = vadd.f32 %v738, %v744
        %v747 = vadd.f32 %v739, %v744
        %v748 = vmin.f32 %v746, 20.0
        %v749 = vmin.f32 %v747, 20.0
        %v750 = vmul.f32 %v748, 1.442695
        %v751 = vpow.pop %v750
        %v752 = vmul.f32 %v749, 1.442695
        %v753 = vpow.pop %v752
        %v754 = vadd.f32 %v751, 2.0
        %v755 = vadd.f32 %v753, 2.0
        %v756 = vmul.f32 %v751, %v754
        %v757 = vmul.f32 %v753, %v755
        %v758 = vadd.f32 %v756, 2.0
        %v759 = vadd.f32 %v757, 2.0
        %v760 = vrcp.pop %v758
        %v761 = vrcp.pop %v759
        %v762 = vmul.f32 %v756, %v760
        %v763 = vmul.f32 %v757, %v761
        %vm764 = vcmp.gt.f32.partialorder %v746, 20.0
        %vm765 = vcmp.gt.f32.partialorder %v747, 20.0
        %v766 = vmul.f32 %v746, %v762
        %v767 = vmul.f32 %v747, %v763
        %v768 = vsel %vm764, %v746, %v766
        %v769 = vsel %vm765, %v747, %v767
        %770 = vst [vmem:[%s259] sm:$0xff] %v768
        %771 = vst [vmem:[%s259 + $0x8] sm:$0xff] %v769
        %s772 = sand.u32 %s160, 1
        %s773 = scalar_lea.sflag [#allocation4], %s772
        %s774 = sand.u32 %s160, 1
        %s775 = smul.addr %s774, 16
        %s776 = scalar_lea.vmem [#allocation5], %s775
        // Predicated region
        $region49: #{tpu_custom_call.1} parent=43 // pred_check
          %p777 = pneg %p170
        $region50: #{tpu_custom_call.1} parent=43 // pred_check_branch
          %779 = sbr.rel (%p777) target = $region52
        $region51: #{tpu_custom_call.1} parent=43 // pred_region
          %s781 = ssub.s32 256, 256
          %782 = vsyncadd %s773, %s781
          %s783 = smul.addr %s21, 2
          %s784 = smul.addr %s783, 128
          %s785 = scalar_lea.hbm %s6, %s784
          %s786 = sshll.u32 %s776, 4
          %s787 = int_to_ptr.vmem [resolvable:$true] %s786
          %792 = dma.vmem_to_hbm [thread:$0]  %s787, 256, %s785, %s773, 128, 128, 8
        $region52: #{tpu_custom_call.1} parent=43 // pred_fallthru
          _
      $region44: #{tpu_custom_call.1} parent=5 // pred_fallthru
        _
      %p793 = scmp.le.s32.totalorder 2, %s16
      // Predicated region
      $region53: #{tpu_custom_call.1} parent=5 // pred_check
        %p794 = pneg %p793
      $region54: #{tpu_custom_call.1} parent=5 // pred_check_branch
        %796 = sbr.rel (%p794) target = $region56
      $region55: #{tpu_custom_call.1} parent=5 // pred_region
        %s797 = ssub.s32 %s16, 2
        // Predicated region
        $region57: #{tpu_custom_call.1} parent=55 // pred_check
          %p798 = pneg %p176
        $region58: #{tpu_custom_call.1} parent=55 // pred_check_branch
          %800 = sbr.rel (%p798) target = $region60
        $region59: #{tpu_custom_call.1} parent=55 // pred_region
          %s801 = sand.u32 %s161, 1
          %s802 = scalar_lea.sflag [#allocation4], %s801
          %s803 = sand.u32 %s161, 1
          %s804 = smul.addr %s803, 16
          %s805 = scalar_lea.vmem [#allocation5], %s804
          %806 = dma.done %s802, 256
        $region60: #{tpu_custom_call.1} parent=55 // pred_fallthru
          _
      $region56: #{tpu_custom_call.1} parent=5 // pred_fallthru
        _
    $region6: #{tpu_custom_call.1} parent=1 // loop_footer
      %s20 = sadd.s32 1, %s16
    $region7: #{tpu_custom_call.1} parent=1 // loop_footer_branch
      %15 = sbr.rel target = $region3
    $region8: #{tpu_custom_call.1} parent=1 // loop_exit
      _
    %807 = vsyncpa [#allocation3], 1
    %s808 = scalar_lea.sflag [#allocation3], 1
    %809 = vsyncpa %s808, 1
    %810 = vsyncpa [#allocation4], 1
    %s811 = scalar_lea.sflag [#allocation4], 1
    %812 = vsyncpa %s811, 1

</llo_original>
